<compile_context>
chip_gen: v7x
topology: tpu7x:2x2x1
jax: 0.10.0
libtpu: 0.0.40
codegen_flags: <defaults>
</compile_context>

<pallas_src>
import jax
import jax.numpy as jnp
from jax.experimental import pallas as pl
from jax.experimental.pallas import tpu as pltpu

H1, H2, OUT = 16, 32, 2  # hidden / output widths of ADmodel.actionfc


def admodel_kernel(x_ref, w1_ref, b1_ref, w2_ref, b2_ref, w3_ref, b3_ref, o_ref):
    # Lane-dense: features on sublanes, batch on the 128-lane axis.
    x = x_ref[...]                                                      # (action_dim, TB)
    # Layer 1: Linear(action_dim, 16) + ReLU
    h1 = jnp.dot(w1_ref[...], x, preferred_element_type=jnp.float32) + b1_ref[...]
    h1 = jnp.maximum(h1, 0.0)                                           # (16, TB)
    # Layer 2: Linear(16, 32) + ReLU
    h2 = jnp.dot(w2_ref[...], h1, preferred_element_type=jnp.float32) + b2_ref[...]
    h2 = jnp.maximum(h2, 0.0)                                           # (32, TB)
    # Layer 3: Linear(32, 2)
    o_ref[...] = jnp.dot(w3_ref[...], h2, preferred_element_type=jnp.float32) + b3_ref[...]


def admodel_forward(action, params, tile_b=512):
    """action: (B, action_dim) float32. params: dict of w1,b1,w2,b2,w3,b3.

    Returns (B, 2) float32, matching PyTorch's actionfc(action).
    """
    B, action_dim = action.shape

    # Batch tile: multiple of 128 (lane width); as big as reasonable to amortize
    # fixed per-step overhead, but no bigger than the (padded) batch itself.
    tb = min(tile_b, ((B + 127) // 128) * 128)
    B_pad = pl.cdiv(B, tb) * tb

    # Transposed, lane-dense input: (action_dim, B_pad); zero-pad the batch tail.
    x_t = action.T
    if B_pad != B:
        x_t = jnp.pad(x_t, ((0, 0), (0, B_pad - B)))

    # Pre-transpose weights / reshape biases so the kernel computes W @ x + b.
    w1_t = params["w1"].T                      # (16, action_dim)
    w2_t = params["w2"].T                      # (32, 16)
    w3_t = params["w3"].T                      # (2, 32)
    b1_t = params["b1"].reshape(H1, 1)
    b2_t = params["b2"].reshape(H2, 1)
    b3_t = params["b3"].reshape(OUT, 1)

    resident = lambda i: (0, 0)  # weights/biases: same block every step -> VMEM-resident

    out_t = pl.pallas_call(
        admodel_kernel,
        out_shape=jax.ShapeDtypeStruct((OUT, B_pad), jnp.float32),
        grid=(B_pad // tb,),
        in_specs=[
            pl.BlockSpec((action_dim, tb), lambda i: (0, i)),   # x tile (lane-dense batch)
            pl.BlockSpec((H1, action_dim), resident),           # w1^T
            pl.BlockSpec((H1, 1), resident),                    # b1
            pl.BlockSpec((H2, H1), resident),                   # w2^T
            pl.BlockSpec((H2, 1), resident),                    # b2
            pl.BlockSpec((OUT, H2), resident),                  # w3^T
            pl.BlockSpec((OUT, 1), resident),                   # b3
        ],
        out_specs=pl.BlockSpec((OUT, tb), lambda i: (0, i)),    # lane-dense output tile
        compiler_params=pltpu.CompilerParams(
            dimension_semantics=("parallel",),  # v7x: shard batch tiles across both TCs
        ),
    )(x_t, w1_t, b1_t, w2_t, b2_t, w3_t, b3_t)

    # Back to PyTorch layout (B, 2); drop padded rows.
    return out_t.T[:B]


def init_params(key, action_dim):
    """Deterministic synthetic init mirroring the nn.Linear shapes of ADmodel.actionfc."""
    ks = jax.random.split(key, 6)

    def linear(kw, kb, fan_in, fan_out):
        # PyTorch default: U(-1/sqrt(fan_in), 1/sqrt(fan_in)) for both W and b.
        bound = 1.0 / jnp.sqrt(jnp.float32(fan_in))
        w = jax.random.uniform(kw, (fan_in, fan_out), jnp.float32, -bound, bound)
        b = jax.random.uniform(kb, (1, fan_out), jnp.float32, -bound, bound)
        return w, b

    w1, b1 = linear(ks[0], ks[1], action_dim, H1)
    w2, b2 = linear(ks[2], ks[3], H1, H2)
    w3, b3 = linear(ks[4], ks[5], H2, OUT)
    return {"w1": w1, "b1": b1, "w2": w2, "b2": b2, "w3": w3, "b3": b3}


def admodel_reference(action, p):
    h1 = jnp.maximum(action @ p["w1"] + p["b1"], 0.0)
    h2 = jnp.maximum(h1 @ p["w2"] + p["b2"], 0.0)
    return h2 @ p["w3"] + p["b3"]


if __name__ == "__main__":
    key = jax.random.PRNGKey(0)
    k_act, k_param, k_act2 = jax.random.split(key, 3)

    batch = 8
    action_dim = 4  # opt.action_dim (synthetic choice)

    action = jax.random.normal(k_act, (batch, action_dim), dtype=jnp.float32)
    params = init_params(k_param, action_dim)

    # Small-batch check (partial tile path).
    out = jax.block_until_ready(admodel_forward(action, params))
    ref = admodel_reference(action, params)
    assert out.shape == (batch, 2)
    assert jnp.allclose(out, ref, atol=1e-5, rtol=1e-5), "Pallas output mismatch vs reference (B=8)"

    # Larger batch exercising the multi-tile grid + resident weights.
    big_batch = 1536  # 3 tiles of 512
    action_big = jax.random.normal(k_act2, (big_batch, action_dim), dtype=jnp.float32)
    out_big = jax.block_until_ready(admodel_forward(action_big, params))
    ref_big = admodel_reference(action_big, params)
    assert out_big.shape == (big_batch, 2)
    assert jnp.allclose(out_big, ref_big, atol=1e-5, rtol=1e-5), "Pallas output mismatch vs reference (B=1536)"

    print("KERNEL_OK")
</pallas_src>

<mosaic_0001>
module attributes {stable_mosaic.version = 11 : i64} {
  func.func @admodel_kernel(%arg0: i32, %arg1: memref<4x128xf32, #tpu.memory_space<vmem>>, %arg2: memref<16x4xf32, #tpu.memory_space<vmem>>, %arg3: memref<16x1xf32, #tpu.memory_space<vmem>>, %arg4: memref<32x16xf32, #tpu.memory_space<vmem>>, %arg5: memref<32x1xf32, #tpu.memory_space<vmem>>, %arg6: memref<2x32xf32, #tpu.memory_space<vmem>>, %arg7: memref<2x1xf32, #tpu.memory_space<vmem>>, %arg8: memref<2x128xf32, #tpu.memory_space<vmem>>) attributes {dimension_semantics = [#tpu.dimension_semantics<parallel>], iteration_bounds = array<i64: 1>, scalar_prefetch = 0 : i64, scratch_operands = 0 : i64, tpu.core_type = #tpu.core_type<tc>, window_params = [{transform_indices = @transform_0, window_bounds = array<i64: 4, 128>}, {pipeline_mode = #tpu.pipeline_mode<synchronous>, transform_indices = @transform_1, window_bounds = array<i64: 16, 4>}, {pipeline_mode = #tpu.pipeline_mode<synchronous>, transform_indices = @transform_2, window_bounds = array<i64: 16, 1>}, {pipeline_mode = #tpu.pipeline_mode<synchronous>, transform_indices = @transform_3, window_bounds = array<i64: 32, 16>}, {pipeline_mode = #tpu.pipeline_mode<synchronous>, transform_indices = @transform_4, window_bounds = array<i64: 32, 1>}, {pipeline_mode = #tpu.pipeline_mode<synchronous>, transform_indices = @transform_5, window_bounds = array<i64: 2, 32>}, {pipeline_mode = #tpu.pipeline_mode<synchronous>, transform_indices = @transform_6, window_bounds = array<i64: 2, 1>}, {transform_indices = @transform_7, window_bounds = array<i64: 2, 128>}]} {
    %c0 = arith.constant 0 : index
    %c0_0 = arith.constant 0 : index
    %0 = vector.load %arg1[%c0, %c0_0] : memref<4x128xf32, #tpu.memory_space<vmem>>, vector<4x128xf32>
    %c0_1 = arith.constant 0 : index
    %c0_2 = arith.constant 0 : index
    %1 = vector.load %arg2[%c0_1, %c0_2] : memref<16x4xf32, #tpu.memory_space<vmem>>, vector<16x4xf32>
    %cst = arith.constant dense<0.000000e+00> : vector<16x128xf32>
    %2 = tpu.matmul %1, %0, %cst {dimension_numbers = #tpu.dot_dimension_numbers<[1], [0], [0], [1], [0, 0, 1, 1], [], []>} : vector<16x4xf32>, vector<4x128xf32>, vector<16x128xf32> -> vector<16x128xf32>
    %c0_3 = arith.constant 0 : index
    %c0_4 = arith.constant 0 : index
    %3 = vector.load %arg3[%c0_3, %c0_4] : memref<16x1xf32, #tpu.memory_space<vmem>>, vector<16x1xf32>
    %4 = vector.broadcast %3 : vector<16x1xf32> to vector<16x128xf32>
    %5 = arith.addf %2, %4 : vector<16x128xf32>
    %cst_5 = arith.constant 0.000000e+00 : f32
    %6 = vector.broadcast %cst_5 : f32 to vector<16x128xf32>
    %7 = arith.maximumf %5, %6 : vector<16x128xf32>
    %c0_6 = arith.constant 0 : index
    %c0_7 = arith.constant 0 : index
    %8 = vector.load %arg4[%c0_6, %c0_7] : memref<32x16xf32, #tpu.memory_space<vmem>>, vector<32x16xf32>
    %cst_8 = arith.constant dense<0.000000e+00> : vector<32x128xf32>
    %9 = tpu.matmul %8, %7, %cst_8 {dimension_numbers = #tpu.dot_dimension_numbers<[1], [0], [0], [1], [0, 0, 1, 1], [], []>} : vector<32x16xf32>, vector<16x128xf32>, vector<32x128xf32> -> vector<32x128xf32>
    %c0_9 = arith.constant 0 : index
    %c0_10 = arith.constant 0 : index
    %10 = vector.load %arg5[%c0_9, %c0_10] : memref<32x1xf32, #tpu.memory_space<vmem>>, vector<32x1xf32>
    %11 = vector.broadcast %10 : vector<32x1xf32> to vector<32x128xf32>
    %12 = arith.addf %9, %11 : vector<32x128xf32>
    %cst_11 = arith.constant 0.000000e+00 : f32
    %13 = vector.broadcast %cst_11 : f32 to vector<32x128xf32>
    %14 = arith.maximumf %12, %13 : vector<32x128xf32>
    %c0_12 = arith.constant 0 : index
    %c0_13 = arith.constant 0 : index
    %15 = vector.load %arg6[%c0_12, %c0_13] : memref<2x32xf32, #tpu.memory_space<vmem>>, vector<2x32xf32>
    %cst_14 = arith.constant dense<0.000000e+00> : vector<2x128xf32>
    %16 = tpu.matmul %15, %14, %cst_14 {dimension_numbers = #tpu.dot_dimension_numbers<[1], [0], [0], [1], [0, 0, 1, 1], [], []>} : vector<2x32xf32>, vector<32x128xf32>, vector<2x128xf32> -> vector<2x128xf32>
    %c0_15 = arith.constant 0 : index
    %c0_16 = arith.constant 0 : index
    %17 = vector.load %arg7[%c0_15, %c0_16] : memref<2x1xf32, #tpu.memory_space<vmem>>, vector<2x1xf32>
    %18 = vector.broadcast %17 : vector<2x1xf32> to vector<2x128xf32>
    %19 = arith.addf %16, %18 : vector<2x128xf32>
    %c0_17 = arith.constant 0 : index
    %c0_18 = arith.constant 0 : index
    %20 = vector.load %arg8[%c0_17, %c0_18] : memref<2x128xf32, #tpu.memory_space<vmem>>, vector<2x128xf32>
    tpu.vector_store %arg8[%c0_17, %c0_18], %19 {strides = array<i32>} : memref<2x128xf32, #tpu.memory_space<vmem>>, vector<2x128xf32>,
    return
  }
  func.func @transform_0(%arg0: i32) -> (i32, i32) {
    %c0_i32 = arith.constant 0 : i32
    %c0_i32_0 = arith.constant 0 : i32
    return %c0_i32, %arg0 : i32, i32
  }
  func.func @transform_1(%arg0: i32) -> (i32, i32) {
    %c0_i32 = arith.constant 0 : i32
    %c0_i32_0 = arith.constant 0 : i32
    %c0_i32_1 = arith.constant 0 : i32
    return %c0_i32, %c0_i32_0 : i32, i32
  }
  func.func @transform_2(%arg0: i32) -> (i32, i32) {
    %c0_i32 = arith.constant 0 : i32
    %c0_i32_0 = arith.constant 0 : i32
    %c0_i32_1 = arith.constant 0 : i32
    return %c0_i32, %c0_i32_0 : i32, i32
  }
  func.func @transform_3(%arg0: i32) -> (i32, i32) {
    %c0_i32 = arith.constant 0 : i32
    %c0_i32_0 = arith.constant 0 : i32
    %c0_i32_1 = arith.constant 0 : i32
    return %c0_i32, %c0_i32_0 : i32, i32
  }
  func.func @transform_4(%arg0: i32) -> (i32, i32) {
    %c0_i32 = arith.constant 0 : i32
    %c0_i32_0 = arith.constant 0 : i32
    %c0_i32_1 = arith.constant 0 : i32
    return %c0_i32, %c0_i32_0 : i32, i32
  }
  func.func @transform_5(%arg0: i32) -> (i32, i32) {
    %c0_i32 = arith.constant 0 : i32
    %c0_i32_0 = arith.constant 0 : i32
    %c0_i32_1 = arith.constant 0 : i32
    return %c0_i32, %c0_i32_0 : i32, i32
  }
  func.func @transform_6(%arg0: i32) -> (i32, i32) {
    %c0_i32 = arith.constant 0 : i32
    %c0_i32_0 = arith.constant 0 : i32
    %c0_i32_1 = arith.constant 0 : i32
    return %c0_i32, %c0_i32_0 : i32, i32
  }
  func.func @transform_7(%arg0: i32) -> (i32, i32) {
    %c0_i32 = arith.constant 0 : i32
    %c0_i32_0 = arith.constant 0 : i32
    return %c0_i32, %arg0 : i32, i32
  }
}

</mosaic_0001>

<llo_original>
// kernel: tpu_custom_call.1
$region0: #{tpu_custom_call.1}
  #allocation0 [shape = 'u32[]', space=smem, size = 0x4, offset = 0x4, fixed_abs, tag = 'smem constant byte address 0x4 - core index']
  #allocation1 [shape = 'u32[144,128]{1,0:T(1,128)}', space=vmem, size = 0x12000, scoped, tag = 'internal scratch']
  %s0 = inlined_call_operand.vmem [shape: f32[4,128], index: 0, kind: input, shape index: {}]
  %s1 = inlined_call_operand.vmem [shape: f32[16,4], index: 1, kind: input, shape index: {}]
  %s2 = inlined_call_operand.vmem [shape: f32[16,1], index: 2, kind: input, shape index: {}]
  %s3 = inlined_call_operand.vmem [shape: f32[32,16], index: 3, kind: input, shape index: {}]
  %s4 = inlined_call_operand.vmem [shape: f32[32,1], index: 4, kind: input, shape index: {}]
  %s5 = inlined_call_operand.vmem [shape: f32[2,32], index: 5, kind: input, shape index: {}]
  %s6 = inlined_call_operand.vmem [shape: f32[2,1], index: 6, kind: input, shape index: {}]
  %s7 = inlined_call_operand.hbm [shape: f32[2,128], index: 7, kind: output, shape index: {}]
  %s8 = sld [smem:[#allocation0]]
  $region38: #{tpu_custom_call.1} parent=0
    _
  %s10 = ssub.s32 1, %s8
  %s11 = scalar_select 0, %s10, %s8
  $region1: #{tpu_custom_call.1} parent=0
    #allocation2 [shape = 'u8[1024]{0}', space=vmem, size = 0x400, scoped, tag = 'output window, operand 0, single buffered']
    #allocation3 [shape = 's32[1]{0}', space=sflag, size = 0x4, scoped, tag = 'scoped memory for tpu_custom_call.1']
    %12 = vsyncpa [#allocation3], 0
    // Predicated region
    $region2: #{tpu_custom_call.1} parent=1 // pred_check
      _
    $region3: #{tpu_custom_call.1} parent=1 // pred_check_branch
      %14 = sbr.rel (0) target = $region5
    $region4: #{tpu_custom_call.1} parent=1 // pred_region
      _
    $region5: #{tpu_custom_call.1} parent=1 // pred_fallthru
      _
    // Predicated region
    $region6: #{tpu_custom_call.1} parent=1 // pred_check
      _
    $region7: #{tpu_custom_call.1} parent=1 // pred_check_branch
      %16 = sbr.rel (0) target = $region9
    $region8: #{tpu_custom_call.1} parent=1 // pred_region
      _
    $region9: #{tpu_custom_call.1} parent=1 // pred_fallthru
      _
    // Predicated region
    $region10: #{tpu_custom_call.1} parent=1 // pred_check
      _
    $region11: #{tpu_custom_call.1} parent=1 // pred_check_branch
      %18 = sbr.rel (0) target = $region13
    $region12: #{tpu_custom_call.1} parent=1 // pred_region
      _
    $region13: #{tpu_custom_call.1} parent=1 // pred_fallthru
      _
    // Predicated region
    $region14: #{tpu_custom_call.1} parent=1 // pred_check
      _
    $region15: #{tpu_custom_call.1} parent=1 // pred_check_branch
      %20 = sbr.rel (0) target = $region17
    $region16: #{tpu_custom_call.1} parent=1 // pred_region
      _
    $region17: #{tpu_custom_call.1} parent=1 // pred_fallthru
      _
    // Predicated region
    $region18: #{tpu_custom_call.1} parent=1 // pred_check
      _
    $region19: #{tpu_custom_call.1} parent=1 // pred_check_branch
      %22 = sbr.rel (0) target = $region21
    $region20: #{tpu_custom_call.1} parent=1 // pred_region
      _
    $region21: #{tpu_custom_call.1} parent=1 // pred_fallthru
      _
    // Predicated region
    $region22: #{tpu_custom_call.1} parent=1 // pred_check
      _
    $region23: #{tpu_custom_call.1} parent=1 // pred_check_branch
      %24 = sbr.rel (0) target = $region25
    $region24: #{tpu_custom_call.1} parent=1 // pred_region
      _
    $region25: #{tpu_custom_call.1} parent=1 // pred_fallthru
      _
    // Predicated region
    $region26: #{tpu_custom_call.1} parent=1 // pred_check
      _
    $region27: #{tpu_custom_call.1} parent=1 // pred_check_branch
      %26 = sbr.rel (0) target = $region29
    $region28: #{tpu_custom_call.1} parent=1 // pred_region
      _
    $region29: #{tpu_custom_call.1} parent=1 // pred_fallthru
      _
    %v27 = vld [vmem:[%s0] sm:$0xf]
    %v28 = vld [vmem:[%s1] sm:$0xff]
    %v29 = vld [vmem:[%s1 + $0x8] sm:$0xff]
    %v30 = vld [vmem:[%s2] sm:$0xff]
    %v31 = vld [vmem:[%s2 + $0x8] sm:$0xff]
    %33 = vset.pattern.permute.xlu0 0
    %34 = vperm.xlu0 %33, %v30
    %v35 = vpop.permute.xlu0 %34
    %38 = vset.pattern.permute.xlu0 0
    %39 = vperm.xlu0 %38, %v31
    %v40 = vpop.permute.xlu0 %39
    %vm42 = vcmask 31744
    %v44 = vsel %vm42, %v28, 0
    %v47 = vsel %vm42, %v29, 0
    %vm49 = vcmask 1043456
    %v51 = vsel %vm49, %v27, 0
    %53 = vmatprep.subr.mxu0 0.0
    %54 = vmatpush1.msra.mxu0 %v51
    %55 = vmatprep.subr.mxu0 0.0
    %56 = vmatpush1.msra.mxu0 0.0
    %57 = vmatprep.subr.mxu0 0.0
    %58 = vmatpush1.msra.mxu0 0.0
    %59 = vmatprep.subr.mxu0 0.0
    %60 = vmatpush1.msra.mxu0 0.0
    %61 = vmatprep.subr.mxu0 0.0
    %62 = vmatpush1.msra.mxu0 0.0
    %63 = vmatprep.subr.mxu0 0.0
    %64 = vmatpush1.msra.mxu0 0.0
    %65 = vmatprep.subr.mxu0 0.0
    %66 = vmatpush1.msra.mxu0 0.0
    %67 = vmatprep.subr.mxu0 0.0
    %68 = vmatpush1.msra.mxu0 0.0
    %69 = vmatprep.subr.mxu0 0.0
    %70 = vmatpush1.msra.mxu0 0.0
    %71 = vmatprep.subr.mxu0 0.0
    %72 = vmatpush1.msra.mxu0 0.0
    %73 = vmatprep.subr.mxu0 0.0
    %74 = vmatpush1.msra.mxu0 0.0
    %75 = vmatprep.subr.mxu0 0.0
    %76 = vmatpush1.msra.mxu0 0.0
    %77 = vmatprep.subr.mxu0 0.0
    %78 = vmatpush1.msra.mxu0 0.0
    %79 = vmatprep.subr.mxu0 0.0
    %80 = vmatpush1.msra.mxu0 0.0
    %81 = vmatprep.subr.mxu0 0.0
    %82 = vmatpush1.msra.mxu0 0.0
    %83 = vmatprep.subr.mxu0 0.0
    %84 = vmatpush1.msra.mxu0 0.0
    %85 = vmatprep.subr.mxu0 0.0
    %86 = vmatpush1.msra.mxu0 0.0
    %87 = vmatprep.subr.mxu0 0.0
    %88 = vmatpush1.msra.mxu0 0.0
    %89 = vmatprep.subr.mxu0 0.0
    %90 = vmatpush1.msra.mxu0 0.0
    %91 = vmatprep.subr.mxu0 0.0
    %92 = vmatpush1.msra.mxu0 0.0
    %93 = vmatprep.subr.mxu0 0.0
    %94 = vmatpush1.msra.mxu0 0.0
    %95 = vmatprep.subr.mxu0 0.0
    %96 = vmatpush1.msra.mxu0 0.0
    %97 = vmatprep.subr.mxu0 0.0
    %98 = vmatpush1.msra.mxu0 0.0
    %99 = vmatprep.subr.mxu0 0.0
    %100 = vmatpush1.msra.mxu0 0.0
    %101 = vmatprep.subr.mxu0 0.0
    %102 = vmatpush1.msra.mxu0 0.0
    %103 = vmatprep.subr.mxu0 0.0
    %104 = vmatpush1.msra.mxu0 0.0
    %105 = vmatprep.subr.mxu0 0.0
    %106 = vmatpush1.msra.mxu0 0.0
    %107 = vmatprep.subr.mxu0 0.0
    %108 = vmatpush1.msra.mxu0 0.0
    %109 = vmatprep.subr.mxu0 0.0
    %110 = vmatpush1.msra.mxu0 0.0
    %111 = vmatprep.subr.mxu0 0.0
    %112 = vmatpush1.msra.mxu0 0.0
    %113 = vmatprep.subr.mxu0 0.0
    %114 = vmatpush1.msra.mxu0 0.0
    %115 = vmatprep.subr.mxu0 0.0
    %116 = vmatpush1.msra.mxu0 0.0
    %117 = vmatprep.mubr.f32.mxu0 0.0
    %118 = vmatmul.mubr.f32.gmra.mrb[0].mxu0 %v44
    %v119 = vpop.f32.mrb[0].mxu0
    %v120 = vadd.f32 %v35, %v119
    %v121 = vpop.f32.mrb[0].mxu0
    %122 = vmatprep.mubr.f32.mxu0 0.0
    %123 = vmatmul.mubr.f32.gmra.mrb[0].mxu0 %v47
    %v124 = vpop.f32.mrb[0].mxu0
    %v125 = vadd.f32 %v40, %v124
    %v126 = vpop.f32.mrb[0].mxu0
    %127 = vdwg.mxu0
    %v128 = vmax.f32 %v120, 0.0
    %v129 = vmax.f32 %v125, 0.0
    %v130 = vld [vmem:[%s3] sm:$0xff]
    %v131 = vld [vmem:[%s3 + $0x8] sm:$0xff]
    %v132 = vld [vmem:[%s3 + $0x10] sm:$0xff]
    %v133 = vld [vmem:[%s3 + $0x18] sm:$0xff]
    %v134 = vld [vmem:[%s4] sm:$0xff]
    %v135 = vld [vmem:[%s4 + $0x8] sm:$0xff]
    %v136 = vld [vmem:[%s4 + $0x10] sm:$0xff]
    %v137 = vld [vmem:[%s4 + $0x18] sm:$0xff]
    %139 = vset.pattern.permute.xlu0 0
    %140 = vperm.xlu0 %139, %v134
    %v141 = vpop.permute.xlu0 %140
    %144 = vset.pattern.permute.xlu0 0
    %145 = vperm.xlu0 %144, %v135
    %v146 = vpop.permute.xlu0 %145
    %149 = vset.pattern.permute.xlu0 0
    %150 = vperm.xlu0 %149, %v136
    %v151 = vpop.permute.xlu0 %150
    %154 = vset.pattern.permute.xlu0 0
    %155 = vperm.xlu0 %154, %v137
    %v156 = vpop.permute.xlu0 %155
    %vm158 = vcmask 130048
    %v160 = vsel %vm158, %v130, 0
    %v163 = vsel %vm158, %v131, 0
    %v166 = vsel %vm158, %v132, 0
    %v169 = vsel %vm158, %v133, 0
    %171 = vmatprep.subr.mxu0 0.0
    %172 = vmatpush1.msra.mxu0 %v128
    %173 = vmatprep.subr.mxu0 0.0
    %174 = vmatpush1.msra.mxu0 %v129
    %175 = vmatprep.subr.mxu0 0.0
    %176 = vmatpush1.msra.mxu0 0.0
    %177 = vmatprep.subr.mxu0 0.0
    %178 = vmatpush1.msra.mxu0 0.0
    %179 = vmatprep.subr.mxu0 0.0
    %180 = vmatpush1.msra.mxu0 0.0
    %181 = vmatprep.subr.mxu0 0.0
    %182 = vmatpush1.msra.mxu0 0.0
    %183 = vmatprep.subr.mxu0 0.0
    %184 = vmatpush1.msra.mxu0 0.0
    %185 = vmatprep.subr.mxu0 0.0
    %186 = vmatpush1.msra.mxu0 0.0
    %187 = vmatprep.subr.mxu0 0.0
    %188 = vmatpush1.msra.mxu0 0.0
    %189 = vmatprep.subr.mxu0 0.0
    %190 = vmatpush1.msra.mxu0 0.0
    %191 = vmatprep.subr.mxu0 0.0
    %192 = vmatpush1.msra.mxu0 0.0
    %193 = vmatprep.subr.mxu0 0.0
    %194 = vmatpush1.msra.mxu0 0.0
    %195 = vmatprep.subr.mxu0 0.0
    %196 = vmatpush1.msra.mxu0 0.0
    %197 = vmatprep.subr.mxu0 0.0
    %198 = vmatpush1.msra.mxu0 0.0
    %199 = vmatprep.subr.mxu0 0.0
    %200 = vmatpush1.msra.mxu0 0.0
    %201 = vmatprep.subr.mxu0 0.0
    %202 = vmatpush1.msra.mxu0 0.0
    %203 = vmatprep.subr.mxu0 0.0
    %204 = vmatpush1.msra.mxu0 0.0
    %205 = vmatprep.subr.mxu0 0.0
    %206 = vmatpush1.msra.mxu0 0.0
    %207 = vmatprep.subr.mxu0 0.0
    %208 = vmatpush1.msra.mxu0 0.0
    %209 = vmatprep.subr.mxu0 0.0
    %210 = vmatpush1.msra.mxu0 0.0
    %211 = vmatprep.subr.mxu0 0.0
    %212 = vmatpush1.msra.mxu0 0.0
    %213 = vmatprep.subr.mxu0 0.0
    %214 = vmatpush1.msra.mxu0 0.0
    %215 = vmatprep.subr.mxu0 0.0
    %216 = vmatpush1.msra.mxu0 0.0
    %217 = vmatprep.subr.mxu0 0.0
    %218 = vmatpush1.msra.mxu0 0.0
    %219 = vmatprep.subr.mxu0 0.0
    %220 = vmatpush1.msra.mxu0 0.0
    %221 = vmatprep.subr.mxu0 0.0
    %222 = vmatpush1.msra.mxu0 0.0
    %223 = vmatprep.subr.mxu0 0.0
    %224 = vmatpush1.msra.mxu0 0.0
    %225 = vmatprep.subr.mxu0 0.0
    %226 = vmatpush1.msra.mxu0 0.0
    %227 = vmatprep.subr.mxu0 0.0
    %228 = vmatpush1.msra.mxu0 0.0
    %229 = vmatprep.subr.mxu0 0.0
    %230 = vmatpush1.msra.mxu0 0.0
    %231 = vmatprep.subr.mxu0 0.0
    %232 = vmatpush1.msra.mxu0 0.0
    %233 = vmatprep.subr.mxu0 0.0
    %234 = vmatpush1.msra.mxu0 0.0
    %235 = vmatprep.mubr.f32.mxu0 0.0
    %236 = vmatmul.mubr.f32.gmra.mrb[0].mxu0 %v160
    %v237 = vpop.f32.mrb[0].mxu0
    %v238 = vadd.f32 %v141, %v237
    %v239 = vpop.f32.mrb[0].mxu0
    %240 = vmatprep.mubr.f32.mxu0 0.0
    %241 = vmatmul.mubr.f32.gmra.mrb[0].mxu0 %v163
    %v242 = vpop.f32.mrb[0].mxu0
    %v243 = vadd.f32 %v146, %v242
    %v244 = vpop.f32.mrb[0].mxu0
    %245 = vmatprep.mubr.f32.mxu0 0.0
    %246 = vmatmul.mubr.f32.gmra.mrb[0].mxu0 %v166
    %v247 = vpop.f32.mrb[0].mxu0
    %v248 = vadd.f32 %v151, %v247
    %v249 = vpop.f32.mrb[0].mxu0
    %250 = vmatprep.mubr.f32.mxu0 0.0
    %251 = vmatmul.mubr.f32.gmra.mrb[0].mxu0 %v169
    %v252 = vpop.f32.mrb[0].mxu0
    %v253 = vadd.f32 %v156, %v252
    %v254 = vpop.f32.mrb[0].mxu0
    %255 = vdwg.mxu0
    %v256 = vmax.f32 %v238, 0.0
    %v257 = vmax.f32 %v243, 0.0
    %v258 = vmax.f32 %v248, 0.0
    %v259 = vmax.f32 %v253, 0.0
    %v260 = vld [vmem:[%s5] sm:$0x3]
    %v261 = vld [vmem:[%s6] sm:$0x3]
    %263 = vset.pattern.permute.xlu0 0
    %264 = vperm.xlu0 %263, %v261
    %v265 = vpop.permute.xlu0 %264
    %vm267 = vcmask 261120
    %v269 = vsel %vm267, %v260, 0
    %271 = vmatprep.subr.mxu0 0.0
    %272 = vmatpush1.msra.mxu0 %v256
    %273 = vmatprep.subr.mxu0 0.0
    %274 = vmatpush1.msra.mxu0 %v257
    %275 = vmatprep.subr.mxu0 0.0
    %276 = vmatpush1.msra.mxu0 %v258
    %277 = vmatprep.subr.mxu0 0.0
    %278 = vmatpush1.msra.mxu0 %v259
    %279 = vmatprep.subr.mxu0 0.0
    %280 = vmatpush1.msra.mxu0 0.0
    %281 = vmatprep.subr.mxu0 0.0
    %282 = vmatpush1.msra.mxu0 0.0
    %283 = vmatprep.subr.mxu0 0.0
    %284 = vmatpush1.msra.mxu0 0.0
    %285 = vmatprep.subr.mxu0 0.0
    %286 = vmatpush1.msra.mxu0 0.0
    %287 = vmatprep.subr.mxu0 0.0
    %288 = vmatpush1.msra.mxu0 0.0
    %289 = vmatprep.subr.mxu0 0.0
    %290 = vmatpush1.msra.mxu0 0.0
    %291 = vmatprep.subr.mxu0 0.0
    %292 = vmatpush1.msra.mxu0 0.0
    %293 = vmatprep.subr.mxu0 0.0
    %294 = vmatpush1.msra.mxu0 0.0
    %295 = vmatprep.subr.mxu0 0.0
    %296 = vmatpush1.msra.mxu0 0.0
    %297 = vmatprep.subr.mxu0 0.0
    %298 = vmatpush1.msra.mxu0 0.0
    %299 = vmatprep.subr.mxu0 0.0
    %300 = vmatpush1.msra.mxu0 0.0
    %301 = vmatprep.subr.mxu0 0.0
    %302 = vmatpush1.msra.mxu0 0.0
    %303 = vmatprep.subr.mxu0 0.0
    %304 = vmatpush1.msra.mxu0 0.0
    %305 = vmatprep.subr.mxu0 0.0
    %306 = vmatpush1.msra.mxu0 0.0
    %307 = vmatprep.subr.mxu0 0.0
    %308 = vmatpush1.msra.mxu0 0.0
    %309 = vmatprep.subr.mxu0 0.0
    %310 = vmatpush1.msra.mxu0 0.0
    %311 = vmatprep.subr.mxu0 0.0
    %312 = vmatpush1.msra.mxu0 0.0
    %313 = vmatprep.subr.mxu0 0.0
    %314 = vmatpush1.msra.mxu0 0.0
    %315 = vmatprep.subr.mxu0 0.0
    %316 = vmatpush1.msra.mxu0 0.0
    %317 = vmatprep.subr.mxu0 0.0
    %318 = vmatpush1.msra.mxu0 0.0
    %319 = vmatprep.subr.mxu0 0.0
    %320 = vmatpush1.msra.mxu0 0.0
    %321 = vmatprep.subr.mxu0 0.0
    %322 = vmatpush1.msra.mxu0 0.0
    %323 = vmatprep.subr.mxu0 0.0
    %324 = vmatpush1.msra.mxu0 0.0
    %325 = vmatprep.subr.mxu0 0.0
    %326 = vmatpush1.msra.mxu0 0.0
    %327 = vmatprep.subr.mxu0 0.0
    %328 = vmatpush1.msra.mxu0 0.0
    %329 = vmatprep.subr.mxu0 0.0
    %330 = vmatpush1.msra.mxu0 0.0
    %331 = vmatprep.subr.mxu0 0.0
    %332 = vmatpush1.msra.mxu0 0.0
    %333 = vmatprep.subr.mxu0 0.0
    %334 = vmatpush1.msra.mxu0 0.0
    %335 = vmatprep.mubr.f32.mxu0 0.0
    %336 = vmatmul.mubr.f32.gmra.mrb[0].mxu0 %v269
    %v337 = vpop.f32.mrb[0].mxu0
    %v338 = vadd.f32 %v265, %v337
    %v339 = vpop.f32.mrb[0].mxu0
    %340 = vdwg.mxu0
    %341 = vst [vmem:[#allocation2] sm:$0x3] %v338
    // Predicated region
    $region30: #{tpu_custom_call.1} parent=1 // pred_check
      _
    $region31: #{tpu_custom_call.1} parent=1 // pred_check_branch
      %343 = sbr.rel (0) target = $region33
    $region32: #{tpu_custom_call.1} parent=1 // pred_region
      %s345 = ssub.s32 32, 32
      %346 = vsyncadd [#allocation3], %s345
      %s348 = sshll.u32 [#allocation2], 4
      %s349 = int_to_ptr.vmem [resolvable:$true] %s348
      %351 = dma.vmem_to_hbm [thread:$0]  %s349, 32, %s7, [#allocation3]
    $region33: #{tpu_custom_call.1} parent=1 // pred_fallthru
      _
    // Predicated region
    $region34: #{tpu_custom_call.1} parent=1 // pred_check
      _
    $region35: #{tpu_custom_call.1} parent=1 // pred_check_branch
      %353 = sbr.rel (0) target = $region37
    $region36: #{tpu_custom_call.1} parent=1 // pred_region
      %354 = dma.done [#allocation3], 32
    $region37: #{tpu_custom_call.1} parent=1 // pred_fallthru
      _
    %355 = vsyncpa [#allocation3], 1

</llo_original>
